<compile_context>
chip_gen: v7x
topology: tpu7x:2x2x1
jax: 0.10.0
libtpu: 0.0.40
codegen_flags: <defaults>
</compile_context>

<pallas_src>
import jax
import jax.numpy as jnp
from jax.experimental import pallas as pl
from jax.experimental.pallas import tpu as pltpu

HIDDEN = 64            # module's hidden width (never touches HBM; no padding)
MAX_BATCH_TILE = 1024  # cap on rows per grid step
MIN_SPLIT_BATCH = 16   # below this, a single full-batch block is used


def _gate_kernel(x_ref, w1_ref, b1_ref, w2_ref, b2_ref, out_ref):
    # Cast x in-kernel so HBM only ever sees the original f32 array once.
    x = x_ref[...].astype(jnp.bfloat16)
    # Layer 1: Linear(in_nodes, 64) + ReLU.  bf16 MXU operands, f32 accumulate;
    # bias-add / ReLU in f32 on the VPU.
    h = jnp.dot(x, w1_ref[...], preferred_element_type=jnp.float32)
    h = jnp.maximum(h + b1_ref[...], 0.0)
    # Head: Linear(64, num_classes).
    out = jnp.dot(h.astype(jnp.bfloat16), w2_ref[...],
                  preferred_element_type=jnp.float32)
    out_ref[...] = out + b2_ref[...]


def prepare_gate_params(w1, b1, w2, b2):
    """Cast weights to bf16 (MXU operands) and biases to f32 row vectors.

    Weights are stored pre-transposed: w1 (in_nodes, 64), w2 (64, num_classes).
    Done once at parameter-setup time, off the per-call path.  No padding is
    needed: hidden stays 64 and the output is stored at its real width."""
    w1p = w1.astype(jnp.bfloat16)
    b1p = b1.reshape(1, -1).astype(jnp.float32)
    w2p = w2.astype(jnp.bfloat16)
    b2p = b2.reshape(1, -1).astype(jnp.float32)
    return w1p, b1p, w2p, b2p


def _round_up(n, m):
    return -(-n // m) * m


@jax.jit
def gate_forward(x, w1p, b1p, w2p, b2p):
    """x: (B, in_nodes) or (B, in_nodes, 1, 1, ...) with size-1 dims at axis 2."""
    # Glue: replicate `while len(x.size()) > 2: x = torch.squeeze(x, 2)`.
    # (torch.squeeze(x, 2) on a non-size-1 dim would loop forever, so require size-1.)
    while x.ndim > 2:
        assert x.shape[2] == 1, "torch.squeeze(x, 2) only removes size-1 dims"
        x = jnp.squeeze(x, axis=2)

    B, in_nodes = x.shape
    hidden = w1p.shape[1]
    num_classes = w2p.shape[1]
    assert hidden == HIDDEN

    # Batch tile selection:
    #  * tiny batches -> one full block (block == array dims exemption)
    #  * otherwise at least 2 grid steps (v7x has 2 TCs), bm a multiple of 8,
    #    capped at MAX_BATCH_TILE.  The last tile may be ragged; row-wise
    #    independence makes that safe (OOB writes are masked).
    if B <= MIN_SPLIT_BATCH:
        bm = B
    else:
        bm = min(MAX_BATCH_TILE, _round_up(-(-B // 2), 8))
    grid_b = pl.cdiv(B, bm)

    cost = pl.CostEstimate(
        flops=2 * B * (in_nodes * hidden + hidden * num_classes),
        transcendentals=0,
        bytes_accessed=(B * in_nodes * 4                 # x (f32, read once)
                        + in_nodes * hidden * 2          # w1 (bf16)
                        + hidden * num_classes * 2       # w2 (bf16)
                        + (hidden + num_classes) * 4     # biases (f32)
                        + B * num_classes * 4),          # out (f32)
    )

    out = pl.pallas_call(
        _gate_kernel,
        out_shape=jax.ShapeDtypeStruct((B, num_classes), jnp.float32),
        grid_spec=pltpu.PrefetchScalarGridSpec(
            num_scalar_prefetch=0,
            grid=(grid_b,),
            in_specs=[
                pl.BlockSpec((bm, in_nodes), lambda i: (i, 0)),           # x: blocked on batch
                pl.BlockSpec((in_nodes, hidden), lambda i: (0, 0)),       # w1: VMEM-resident
                pl.BlockSpec((1, hidden), lambda i: (0, 0)),              # b1
                pl.BlockSpec((hidden, num_classes), lambda i: (0, 0)),    # w2
                pl.BlockSpec((1, num_classes), lambda i: (0, 0)),         # b2
            ],
            out_specs=pl.BlockSpec((bm, num_classes), lambda i: (i, 0)),
        ),
        compiler_params=pltpu.CompilerParams(
            dimension_semantics=("parallel",)),
        cost_estimate=cost,
    )(x, w1p, b1p, w2p, b2p)

    return out


if __name__ == "__main__":
    # TODO(synk): dropout branch (nn.Dropout(0.5), dropout=True) not implemented; eval path only.
    key = jax.random.PRNGKey(0)
    kx, kx2, k1, k2 = jax.random.split(key, 4)

    in_nodes, num_classes = 32, 10

    # PyTorch Linear weight is (out, in); store transposed (in, out) for x @ W.
    w1 = jax.random.normal(k1, (in_nodes, HIDDEN), jnp.float32) * jnp.sqrt(2.0 / in_nodes)
    b1 = jnp.zeros((HIDDEN,), jnp.float32)
    w2 = jax.random.normal(k2, (HIDDEN, num_classes), jnp.float32) * jnp.sqrt(2.0 / HIDDEN)
    b2 = jnp.zeros((num_classes,), jnp.float32)
    w1p, b1p, w2p, b2p = prepare_gate_params(w1, b1, w2, b2)

    def ref_fn(x2):
        return jnp.maximum(x2 @ w1 + b1, 0.0) @ w2 + b2

    # Case 1: small batch, single-block path.  Input shaped like a pooled CNN
    # feature map (B, in_nodes, 1, 1); the forward squeezes the singleton dims.
    B1 = 8
    x1 = jax.random.normal(kx, (B1, in_nodes, 1, 1), jnp.float32)
    out1 = jax.block_until_ready(gate_forward(x1, w1p, b1p, w2p, b2p))
    ref1 = ref_fn(x1.reshape(B1, in_nodes))
    assert out1.shape == (B1, num_classes)
    assert jnp.allclose(out1, ref1, atol=5e-2, rtol=5e-2), \
        float(jnp.max(jnp.abs(out1 - ref1)))

    # Case 2: multi-step grid with a ragged last tile (B=40 -> bm=24, grid=2).
    B2 = 40
    x2 = jax.random.normal(kx2, (B2, in_nodes), jnp.float32)
    out2 = jax.block_until_ready(gate_forward(x2, w1p, b1p, w2p, b2p))
    ref2 = ref_fn(x2)
    assert out2.shape == (B2, num_classes)
    assert jnp.allclose(out2, ref2, atol=5e-2, rtol=5e-2), \
        float(jnp.max(jnp.abs(out2 - ref2)))

    print("KERNEL_OK")
</pallas_src>

<mosaic_0001>
module attributes {stable_mosaic.version = 11 : i64} {
  func.func @_gate_kernel(%arg0: i32, %arg1: memref<8x32xf32, #tpu.memory_space<vmem>>, %arg2: memref<32x64xbf16, #tpu.memory_space<vmem>>, %arg3: memref<1x64xf32, #tpu.memory_space<vmem>>, %arg4: memref<64x10xbf16, #tpu.memory_space<vmem>>, %arg5: memref<1x10xf32, #tpu.memory_space<vmem>>, %arg6: memref<8x10xf32, #tpu.memory_space<vmem>>) attributes {dimension_semantics = [#tpu.dimension_semantics<parallel>], iteration_bounds = array<i64: 1>, scalar_prefetch = 0 : i64, scratch_operands = 0 : i64, tpu.core_type = #tpu.core_type<tc>, window_params = [{transform_indices = @transform_0, window_bounds = array<i64: 8, 32>}, {pipeline_mode = #tpu.pipeline_mode<synchronous>, transform_indices = @transform_1, window_bounds = array<i64: 32, 64>}, {pipeline_mode = #tpu.pipeline_mode<synchronous>, transform_indices = @transform_2, window_bounds = array<i64: 1, 64>}, {pipeline_mode = #tpu.pipeline_mode<synchronous>, transform_indices = @transform_3, window_bounds = array<i64: 64, 10>}, {pipeline_mode = #tpu.pipeline_mode<synchronous>, transform_indices = @transform_4, window_bounds = array<i64: 1, 10>}, {transform_indices = @transform_5, window_bounds = array<i64: 8, 10>}]} {
    %c0 = arith.constant 0 : index
    %c0_0 = arith.constant 0 : index
    %0 = vector.load %arg1[%c0, %c0_0] : memref<8x32xf32, #tpu.memory_space<vmem>>, vector<8x32xf32>
    %1 = arith.truncf %0 : vector<8x32xf32> to vector<8x32xbf16>
    %c0_1 = arith.constant 0 : index
    %c0_2 = arith.constant 0 : index
    %2 = vector.load %arg2[%c0_1, %c0_2] : memref<32x64xbf16, #tpu.memory_space<vmem>>, vector<32x64xbf16>
    %cst = arith.constant dense<0.000000e+00> : vector<8x64xf32>
    %3 = tpu.matmul %1, %2, %cst {dimension_numbers = #tpu.dot_dimension_numbers<[1], [0], [0], [1], [0, 0, 1, 1], [], []>} : vector<8x32xbf16>, vector<32x64xbf16>, vector<8x64xf32> -> vector<8x64xf32>
    %c0_3 = arith.constant 0 : index
    %c0_4 = arith.constant 0 : index
    %4 = vector.load %arg3[%c0_3, %c0_4] : memref<1x64xf32, #tpu.memory_space<vmem>>, vector<1x64xf32>
    %5 = vector.broadcast %4 : vector<1x64xf32> to vector<8x64xf32>
    %6 = arith.addf %3, %5 : vector<8x64xf32>
    %cst_5 = arith.constant 0.000000e+00 : f32
    %7 = vector.broadcast %cst_5 : f32 to vector<8x64xf32>
    %8 = arith.maximumf %6, %7 : vector<8x64xf32>
    %9 = arith.truncf %8 : vector<8x64xf32> to vector<8x64xbf16>
    %c0_6 = arith.constant 0 : index
    %c0_7 = arith.constant 0 : index
    %10 = vector.load %arg4[%c0_6, %c0_7] : memref<64x10xbf16, #tpu.memory_space<vmem>>, vector<64x10xbf16>
    %cst_8 = arith.constant dense<0.000000e+00> : vector<8x10xf32>
    %11 = tpu.matmul %9, %10, %cst_8 {dimension_numbers = #tpu.dot_dimension_numbers<[1], [0], [0], [1], [0, 0, 1, 1], [], []>} : vector<8x64xbf16>, vector<64x10xbf16>, vector<8x10xf32> -> vector<8x10xf32>
    %c0_9 = arith.constant 0 : index
    %c0_10 = arith.constant 0 : index
    %12 = vector.load %arg5[%c0_9, %c0_10] : memref<1x10xf32, #tpu.memory_space<vmem>>, vector<1x10xf32>
    %13 = vector.broadcast %12 : vector<1x10xf32> to vector<8x10xf32>
    %14 = arith.addf %11, %13 : vector<8x10xf32>
    %c0_11 = arith.constant 0 : index
    %c0_12 = arith.constant 0 : index
    %15 = vector.load %arg6[%c0_11, %c0_12] : memref<8x10xf32, #tpu.memory_space<vmem>>, vector<8x10xf32>
    tpu.vector_store %arg6[%c0_11, %c0_12], %14 {strides = array<i32>} : memref<8x10xf32, #tpu.memory_space<vmem>>, vector<8x10xf32>,
    return
  }
  func.func @transform_0(%arg0: i32) -> (i32, i32) {
    %c0_i32 = arith.constant 0 : i32
    %c0_i32_0 = arith.constant 0 : i32
    return %arg0, %c0_i32 : i32, i32
  }
  func.func @transform_1(%arg0: i32) -> (i32, i32) {
    %c0_i32 = arith.constant 0 : i32
    %c0_i32_0 = arith.constant 0 : i32
    %c0_i32_1 = arith.constant 0 : i32
    return %c0_i32, %c0_i32_0 : i32, i32
  }
  func.func @transform_2(%arg0: i32) -> (i32, i32) {
    %c0_i32 = arith.constant 0 : i32
    %c0_i32_0 = arith.constant 0 : i32
    %c0_i32_1 = arith.constant 0 : i32
    return %c0_i32, %c0_i32_0 : i32, i32
  }
  func.func @transform_3(%arg0: i32) -> (i32, i32) {
    %c0_i32 = arith.constant 0 : i32
    %c0_i32_0 = arith.constant 0 : i32
    %c0_i32_1 = arith.constant 0 : i32
    return %c0_i32, %c0_i32_0 : i32, i32
  }
  func.func @transform_4(%arg0: i32) -> (i32, i32) {
    %c0_i32 = arith.constant 0 : i32
    %c0_i32_0 = arith.constant 0 : i32
    %c0_i32_1 = arith.constant 0 : i32
    return %c0_i32, %c0_i32_0 : i32, i32
  }
  func.func @transform_5(%arg0: i32) -> (i32, i32) {
    %c0_i32 = arith.constant 0 : i32
    %c0_i32_0 = arith.constant 0 : i32
    return %arg0, %c0_i32 : i32, i32
  }
}

</mosaic_0001>

<llo_original>
// kernel: gate_forward.1
$region0: #{gate_forward.1}
  #allocation0 [shape = 'u32[]', space=smem, size = 0x4, offset = 0x4, fixed_abs, tag = 'smem constant byte address 0x4 - core index']
  #allocation1 [shape = 'u32[144,128]{1,0:T(1,128)}', space=vmem, size = 0x12000, scoped, tag = 'internal scratch']
  %s0 = inlined_call_operand.vmem [shape: f32[8,32], index: 0, kind: input, shape index: {}]
  %s1 = inlined_call_operand.vmem [shape: bf16[32,64], index: 1, kind: input, shape index: {}]
  %s2 = inlined_call_operand.vmem [shape: f32[1,64], index: 2, kind: input, shape index: {}]
  %s3 = inlined_call_operand.vmem [shape: bf16[64,10], index: 3, kind: input, shape index: {}]
  %s4 = inlined_call_operand.vmem [shape: f32[1,10], index: 4, kind: input, shape index: {}]
  %s5 = inlined_call_operand.hbm [shape: f32[8,10], index: 5, kind: output, shape index: {}]
  %s6 = sld [smem:[#allocation0]]
  $region30: #{gate_forward.1} parent=0
    _
  %s8 = ssub.s32 1, %s6
  %s9 = scalar_select 0, %s8, %s6
  $region1: #{gate_forward.1} parent=0
    #allocation2 [shape = 'u8[4096]{0}', space=vmem, size = 0x1000, scoped, tag = 'output window, operand 0, single buffered']
    #allocation3 [shape = 's32[1]{0}', space=sflag, size = 0x4, scoped, tag = 'scoped memory for gate_forward.1']
    %10 = vsyncpa [#allocation3], 0
    // Predicated region
    $region2: #{gate_forward.1} parent=1 // pred_check
      _
    $region3: #{gate_forward.1} parent=1 // pred_check_branch
      %12 = sbr.rel (0) target = $region5
    $region4: #{gate_forward.1} parent=1 // pred_region
      _
    $region5: #{gate_forward.1} parent=1 // pred_fallthru
      _
    // Predicated region
    $region6: #{gate_forward.1} parent=1 // pred_check
      _
    $region7: #{gate_forward.1} parent=1 // pred_check_branch
      %14 = sbr.rel (0) target = $region9
    $region8: #{gate_forward.1} parent=1 // pred_region
      _
    $region9: #{gate_forward.1} parent=1 // pred_fallthru
      _
    // Predicated region
    $region10: #{gate_forward.1} parent=1 // pred_check
      _
    $region11: #{gate_forward.1} parent=1 // pred_check_branch
      %16 = sbr.rel (0) target = $region13
    $region12: #{gate_forward.1} parent=1 // pred_region
      _
    $region13: #{gate_forward.1} parent=1 // pred_fallthru
      _
    // Predicated region
    $region14: #{gate_forward.1} parent=1 // pred_check
      _
    $region15: #{gate_forward.1} parent=1 // pred_check_branch
      %18 = sbr.rel (0) target = $region17
    $region16: #{gate_forward.1} parent=1 // pred_region
      _
    $region17: #{gate_forward.1} parent=1 // pred_fallthru
      _
    // Predicated region
    $region18: #{gate_forward.1} parent=1 // pred_check
      _
    $region19: #{gate_forward.1} parent=1 // pred_check_branch
      %20 = sbr.rel (0) target = $region21
    $region20: #{gate_forward.1} parent=1 // pred_region
      _
    $region21: #{gate_forward.1} parent=1 // pred_fallthru
      _
    %v22 = vld [vmem:[%s0] sm:$0xff]
    %v23 = vpack.c.bf16 %v22, %v22
    %v24 = vld [vmem:[%s1] sm:$0xf]
    %v25 = vld [vmem:[%s1 + $0x4] sm:$0xf]
    %v26 = vld [vmem:[%s1 + $0x8] sm:$0xf]
    %v27 = vld [vmem:[%s1 + $0xc] sm:$0xf]
    %v28 = vld [vmem:[%s2] sm:$0x1]
    %v30 = vlaneseq
    %v31 = vshrl.u32 %v30, 7
    %v32 = vsub.s32 0, %v31
    %v33 = vrot.slane %v28, %v32
    %v39 = vunpack.c.l.b16 %v24
    %v40 = vunpack.c.l.b16 %v25
    %v41 = vunpack.c.l.b16 %v26
    %v42 = vunpack.c.l.b16 %v27
    %v43 = vpack.c.b16 %v40, %v39
    %v44 = vpack.c.b16 %v42, %v41
    %vm47 = vcmask 261120
    %v49 = vsel %vm47, %v23, 0
    %51 = vmatprep.subr.bf16.mxu0 0
    %52 = vmatpush1.bf16.msra.mxu0 %v43
    %53 = vmatprep.subr.bf16.mxu0 0
    %54 = vmatpush1.bf16.msra.mxu0 %v44
    %55 = vmatprep.subr.bf16.mxu0 0
    %56 = vmatpush1.bf16.msra.mxu0 0
    %57 = vmatprep.subr.bf16.mxu0 0
    %58 = vmatpush1.bf16.msra.mxu0 0
    %59 = vmatprep.subr.bf16.mxu0 0
    %60 = vmatpush1.bf16.msra.mxu0 0
    %61 = vmatprep.subr.bf16.mxu0 0
    %62 = vmatpush1.bf16.msra.mxu0 0
    %63 = vmatprep.subr.bf16.mxu0 0
    %64 = vmatpush1.bf16.msra.mxu0 0
    %65 = vmatprep.subr.bf16.mxu0 0
    %66 = vmatpush1.bf16.msra.mxu0 0
    %67 = vmatprep.subr.bf16.mxu0 0
    %68 = vmatpush1.bf16.msra.mxu0 0
    %69 = vmatprep.subr.bf16.mxu0 0
    %70 = vmatpush1.bf16.msra.mxu0 0
    %71 = vmatprep.subr.bf16.mxu0 0
    %72 = vmatpush1.bf16.msra.mxu0 0
    %73 = vmatprep.subr.bf16.mxu0 0
    %74 = vmatpush1.bf16.msra.mxu0 0
    %75 = vmatprep.subr.bf16.mxu0 0
    %76 = vmatpush1.bf16.msra.mxu0 0
    %77 = vmatprep.subr.bf16.mxu0 0
    %78 = vmatpush1.bf16.msra.mxu0 0
    %79 = vmatprep.subr.bf16.mxu0 0
    %80 = vmatpush1.bf16.msra.mxu0 0
    %81 = vmatprep.subr.bf16.mxu0 0
    %82 = vmatpush1.bf16.msra.mxu0 0
    %83 = vmatprep.mubr.bf16.mxu0 0
    %84 = vmatmul.mubr.bf16.gmra.mrb[0].mxu0 %v49
    %v85 = vpop.f32.mrb[0].mxu0
    %v86 = vadd.f32 %v33, %v85
    %v87 = vpop.f32.mrb[0].mxu0
    %v88 = vpop.f32.mrb[0].mxu0
    %v89 = vpop.f32.mrb[0].mxu0
    %90 = vdwg.mxu0
    %v91 = vmax.f32 %v86, 0.0
    %v92 = vpack.c.bf16 %v91, %v91
    %v93 = vld [vmem:[%s3] sm:$0xf]
    %v94 = vld [vmem:[%s3 + $0x4] sm:$0xf]
    %v95 = vld [vmem:[%s3 + $0x8] sm:$0xf]
    %v96 = vld [vmem:[%s3 + $0xc] sm:$0xf]
    %v97 = vld [vmem:[%s3 + $0x10] sm:$0xf]
    %v98 = vld [vmem:[%s3 + $0x14] sm:$0xf]
    %v99 = vld [vmem:[%s3 + $0x18] sm:$0xf]
    %v100 = vld [vmem:[%s3 + $0x1c] sm:$0xf]
    %v101 = vld [vmem:[%s4] sm:$0x1]
    %v103 = vlaneseq
    %v104 = vshrl.u32 %v103, 7
    %v105 = vsub.s32 0, %v104
    %v106 = vrot.slane %v101, %v105
    %v116 = vunpack.c.l.b16 %v93
    %v117 = vunpack.c.l.b16 %v94
    %v118 = vunpack.c.l.b16 %v95
    %v119 = vunpack.c.l.b16 %v96
    %v120 = vunpack.c.l.b16 %v97
    %v121 = vunpack.c.l.b16 %v98
    %v122 = vunpack.c.l.b16 %v99
    %v123 = vunpack.c.l.b16 %v100
    %v124 = vpack.c.b16 %v117, %v116
    %v125 = vpack.c.b16 %v119, %v118
    %v126 = vpack.c.b16 %v121, %v120
    %v127 = vpack.c.b16 %v123, %v122
    %vm132 = vcmask 523264
    %v134 = vsel %vm132, %v92, 0
    %136 = vmatprep.subr.bf16.mxu0 0
    %137 = vmatpush1.bf16.msra.mxu0 %v124
    %138 = vmatprep.subr.bf16.mxu0 0
    %139 = vmatpush1.bf16.msra.mxu0 %v125
    %140 = vmatprep.subr.bf16.mxu0 0
    %141 = vmatpush1.bf16.msra.mxu0 %v126
    %142 = vmatprep.subr.bf16.mxu0 0
    %143 = vmatpush1.bf16.msra.mxu0 %v127
    %144 = vmatprep.subr.bf16.mxu0 0
    %145 = vmatpush1.bf16.msra.mxu0 0
    %146 = vmatprep.subr.bf16.mxu0 0
    %147 = vmatpush1.bf16.msra.mxu0 0
    %148 = vmatprep.subr.bf16.mxu0 0
    %149 = vmatpush1.bf16.msra.mxu0 0
    %150 = vmatprep.subr.bf16.mxu0 0
    %151 = vmatpush1.bf16.msra.mxu0 0
    %152 = vmatprep.subr.bf16.mxu0 0
    %153 = vmatpush1.bf16.msra.mxu0 0
    %154 = vmatprep.subr.bf16.mxu0 0
    %155 = vmatpush1.bf16.msra.mxu0 0
    %156 = vmatprep.subr.bf16.mxu0 0
    %157 = vmatpush1.bf16.msra.mxu0 0
    %158 = vmatprep.subr.bf16.mxu0 0
    %159 = vmatpush1.bf16.msra.mxu0 0
    %160 = vmatprep.subr.bf16.mxu0 0
    %161 = vmatpush1.bf16.msra.mxu0 0
    %162 = vmatprep.subr.bf16.mxu0 0
    %163 = vmatpush1.bf16.msra.mxu0 0
    %164 = vmatprep.subr.bf16.mxu0 0
    %165 = vmatpush1.bf16.msra.mxu0 0
    %166 = vmatprep.subr.bf16.mxu0 0
    %167 = vmatpush1.bf16.msra.mxu0 0
    %168 = vmatprep.mubr.bf16.mxu0 0
    %169 = vmatmul.mubr.bf16.gmra.mrb[0].mxu0 %v134
    %v170 = vpop.f32.mrb[0].mxu0
    %v171 = vadd.f32 %v106, %v170
    %v172 = vpop.f32.mrb[0].mxu0
    %v173 = vpop.f32.mrb[0].mxu0
    %v174 = vpop.f32.mrb[0].mxu0
    %175 = vdwg.mxu0
    %vm176 = vcmask 80896
    %177 = vst.msk [vmem:[#allocation2] sm:$0xff] %vm176, %v171
    // Predicated region
    $region22: #{gate_forward.1} parent=1 // pred_check
      _
    $region23: #{gate_forward.1} parent=1 // pred_check_branch
      %179 = sbr.rel (0) target = $region25
    $region24: #{gate_forward.1} parent=1 // pred_region
      %s181 = ssub.s32 128, 128
      %182 = vsyncadd [#allocation3], %s181
      %s184 = sshll.u32 [#allocation2], 4
      %s185 = int_to_ptr.vmem [resolvable:$true] %s184
      %187 = dma.vmem_to_hbm [thread:$0]  %s185, 128, %s5, [#allocation3]
    $region25: #{gate_forward.1} parent=1 // pred_fallthru
      _
    // Predicated region
    $region26: #{gate_forward.1} parent=1 // pred_check
      _
    $region27: #{gate_forward.1} parent=1 // pred_check_branch
      %189 = sbr.rel (0) target = $region29
    $region28: #{gate_forward.1} parent=1 // pred_region
      %190 = dma.done [#allocation3], 128
    $region29: #{gate_forward.1} parent=1 // pred_fallthru
      _
    %191 = vsyncpa [#allocation3], 1

</llo_original>
